<compile_context>
chip_gen: v7x
topology: tpu7x:2x2x1
jax: 0.10.0
libtpu: 0.0.40
codegen_flags: <defaults>
</compile_context>

<pallas_src>
import functools

import jax
import jax.numpy as jnp
from jax.experimental import pallas as pl
from jax.experimental.pallas import tpu as pltpu

LANE = 128


def _round_up(n, m):
    return ((n + m - 1) // m) * m


def cnn_kernel(ids_ref, emb_w_ref, conv_w_ref, conv_b_ref, fc_w_ref, fc_b_ref,
               out_ref, *, KH, E, stride, Sp_pad, S_out):
    M, _ = ids_ref.shape                       # M = bt * Sp_pad  (multiple of 8)
    V_pad, E_pad = emb_w_ref.shape
    K_pad, C_pad = conv_w_ref.shape
    bt = out_ref.shape[0]

    # (1) Embedding gather as a one-hot GEMM on the MXU (bf16 operands, f32 accumulate).
    ids = ids_ref[...]                                               # (M, 1) int32
    iota = jax.lax.broadcasted_iota(jnp.int32, (M, V_pad), 1)
    onehot = jnp.where(iota == ids, 1.0, 0.0)                        # f32 on the VPU
    emb = jnp.dot(onehot.astype(jnp.bfloat16), emb_w_ref[...],
                  preferred_element_type=jnp.float32)                # (M, E_pad) f32

    # Widen to the fused-conv K width (lane-aligned zero pad; no-op when K_pad == E_pad).
    if K_pad > E_pad:
        emb = jnp.concatenate(
            [emb, jnp.zeros((M, K_pad - E_pad), jnp.float32)], axis=1)

    # (2) Pack the KH conv taps along the lane axis with XLU rolls (no misaligned-slice
    #     relayouts):  x_cat[r, kh*E + e] = emb[r + kh, e].
    #     pltpu.roll follows jnp.roll: result[i] = x[(i - shift) mod n].
    x_cat = emb
    for kh in range(1, KH):                                          # static unroll
        tap = pltpu.roll(emb, shift=M - kh, axis=0)                  # rows: tap[r] = emb[r+kh]
        tap = pltpu.roll(tap, shift=kh * E, axis=1)                  # lanes -> [kh*E, kh*E+E)
        x_cat = x_cat + tap

    # (3) Single fused conv GEMM over all Sp_pad positions + bias + ReLU (f32).
    acc = jnp.dot(x_cat.astype(jnp.bfloat16), conv_w_ref[...],
                  preferred_element_type=jnp.float32) + conv_b_ref[...]
    act = jnp.maximum(acc, 0.0)                                      # (M, C_pad)

    # (4) Max-pool over time (sublane reduction; C stays on lanes).  Rows that are not
    #     valid conv output positions (Sp_pad filler / stride-skipped / roll bleed) are
    #     zeroed; post-ReLU the valid max is >= 0 so zeros never win incorrectly.
    act3 = act.reshape(bt, Sp_pad, C_pad)                            # aligned: Sp_pad % 8 == 0
    t_idx = jax.lax.broadcasted_iota(jnp.int32, (bt, Sp_pad, C_pad), 1)
    valid = t_idx < S_out * stride
    if stride > 1:
        valid = jnp.logical_and(valid, t_idx % stride == 0)
    pooled = jnp.max(jnp.where(valid, act3, 0.0), axis=1)            # (bt, C_pad) f32

    # (5) Dropout(0.3) is identity in eval mode; final Linear on the MXU.
    out = jnp.dot(pooled.astype(jnp.bfloat16), fc_w_ref[...],
                  preferred_element_type=jnp.float32) + fc_b_ref[...]
    out_ref[...] = out.astype(out_ref.dtype)                         # lane-dense (bt, O_pad)


def cnn_forward(x, emb_w, conv_w, conv_b, fc_w, fc_b, *,
                kernel_heights, stride, padding):
    B, S = x.shape
    V, E = emb_w.shape
    C = conv_w.shape[0]
    O = fc_w.shape[0]
    KH = kernel_heights
    Sp = S + 2 * padding
    S_out = (Sp - KH) // stride + 1
    assert S_out >= 1

    V_pad = _round_up(V + 1, LANE)      # reserve >= 1 guaranteed-zero row for seq padding
    E_pad = _round_up(E, LANE)
    K_pad = _round_up(KH * E, LANE)     # fused conv K (all taps packed along lanes)
    C_pad = _round_up(C, LANE)
    O_pad = _round_up(O, LANE)
    pad_id = V                          # index of a zero row in the padded table
    Sp_pad = _round_up(Sp, 8)           # keep in-kernel reshapes (8,128)-aligned

    # Batch tile: MXU-sized GEMM M (bt*S_out ~ 256), >= 2 grid steps for v7x when B
    # allows, batch padded to a tile multiple (bounded per-tile VMEM at any B).
    bt = _round_up(pl.cdiv(256, S_out), 8)
    if B >= 16:
        bt = min(bt, _round_up(pl.cdiv(B, 2), 8))
    bt = min(bt, _round_up(B, 8))
    B_pad = _round_up(B, bt)
    grid = (B_pad // bt,)

    # Token ids, padded with pad_id: `padding` leading/trailing zeros of Conv2d, plus
    # Sp->Sp_pad and B->B_pad filler (filler rows/positions are masked / sliced away).
    ids = jnp.full((B_pad, Sp_pad), pad_id, jnp.int32)
    ids = ids.at[:B, padding:padding + S].set(x.astype(jnp.int32))
    ids = ids.reshape(B_pad * Sp_pad, 1)

    # Lane-dense, zero-padded parameters (bf16 MXU operands; biases stay f32).
    emb_w_pad = jnp.zeros((V_pad, E_pad), jnp.bfloat16)
    emb_w_pad = emb_w_pad.at[:V, :E].set(emb_w.astype(jnp.bfloat16))
    w_kec = jnp.transpose(conv_w[:, 0], (1, 2, 0)).reshape(KH * E, C)   # rows = kh*E + e
    conv_w_pad = jnp.zeros((K_pad, C_pad), jnp.bfloat16)
    conv_w_pad = conv_w_pad.at[:KH * E, :C].set(w_kec.astype(jnp.bfloat16))
    conv_b_pad = jnp.zeros((1, C_pad), jnp.float32).at[0, :C].set(conv_b)
    fc_w_pad = jnp.zeros((C_pad, O_pad), jnp.bfloat16)
    fc_w_pad = fc_w_pad.at[:C, :O].set(fc_w.T.astype(jnp.bfloat16))
    fc_b_pad = jnp.zeros((1, O_pad), jnp.float32).at[0, :O].set(fc_b)

    kernel = functools.partial(cnn_kernel, KH=KH, E=E, stride=stride,
                               Sp_pad=Sp_pad, S_out=S_out)
    out_pad = pl.pallas_call(
        kernel,
        out_shape=jax.ShapeDtypeStruct((B_pad, O_pad), jnp.float32),
        grid=grid,
        in_specs=[
            pl.BlockSpec((bt * Sp_pad, 1), lambda b: (b, 0)),        # ids (flattened)
            pl.BlockSpec((V_pad, E_pad), lambda b: (0, 0)),          # emb table (bf16)
            pl.BlockSpec((K_pad, C_pad), lambda b: (0, 0)),          # packed conv weight
            pl.BlockSpec((1, C_pad), lambda b: (0, 0)),              # conv bias (f32)
            pl.BlockSpec((C_pad, O_pad), lambda b: (0, 0)),          # fc weight (bf16)
            pl.BlockSpec((1, O_pad), lambda b: (0, 0)),              # fc bias (f32)
        ],
        out_specs=pl.BlockSpec((bt, O_pad), lambda b: (b, 0)),
        compiler_params=pltpu.CompilerParams(
            dimension_semantics=("parallel",)),
    )(ids, emb_w_pad, conv_w_pad, conv_b_pad, fc_w_pad, fc_b_pad)
    return out_pad[:B, :O]


def cnn_reference(x, emb_w, conv_w, conv_b, fc_w, fc_b, *,
                  kernel_heights, stride, padding, mxu_dtype=jnp.float32):
    # Pure-JAX reference of the PyTorch forward (eval mode, dropout = identity).
    # mxu_dtype rounds the matmul operands the same way the kernel does (bf16 on MXU).
    f = lambda a: a.astype(mxu_dtype).astype(jnp.float32)
    KH = kernel_heights
    emb = jnp.take(f(emb_w), x, axis=0)                              # (B, S, E)
    emb_p = jnp.pad(emb, ((0, 0), (padding, padding), (0, 0)))
    S_out = (x.shape[1] + 2 * padding - KH) // stride + 1
    w = f(conv_w[:, 0])                                              # (C, KH, E)
    conv = jnp.stack(
        [jnp.einsum("bke,cke->bc", emb_p[:, t * stride:t * stride + KH, :], w)
         for t in range(S_out)],
        axis=2) + conv_b[None, :, None]                              # (B, C, S_out)
    act = jnp.maximum(conv, 0.0)
    pooled = jnp.max(act, axis=2)                                    # (B, C)
    return f(pooled) @ f(fc_w).T + fc_b


if __name__ == "__main__":
    # Module hyperparameters (small, consistent with the forward pass).
    vocab_size, emb_size, padding_idx = 50, 16, 0
    output_size, out_channels = 4, 8
    kernel_heights, stride, padding = 3, 1, 1
    B, S = 2, 8

    key = jax.random.PRNGKey(0)
    k1, k2, k3, k4, k5, k6 = jax.random.split(key, 6)

    # Deterministic synthetic parameters (shapes from nn.Embedding / nn.Conv2d / nn.Linear).
    emb_w = jax.random.normal(k1, (vocab_size, emb_size), jnp.float32)
    emb_w = emb_w.at[padding_idx].set(0.0)                           # padding_idx row is zero
    conv_w = 0.1 * jax.random.normal(
        k2, (out_channels, 1, kernel_heights, emb_size), jnp.float32)
    conv_b = 0.1 * jax.random.normal(k3, (out_channels,), jnp.float32)
    fc_w = 0.1 * jax.random.normal(k4, (output_size, out_channels), jnp.float32)
    fc_b = 0.1 * jax.random.normal(k5, (output_size,), jnp.float32)

    x = jax.random.randint(k6, (B, S), 0, vocab_size, dtype=jnp.int32)

    out = cnn_forward(x, emb_w, conv_w, conv_b, fc_w, fc_b,
                      kernel_heights=kernel_heights, stride=stride,
                      padding=padding)
    out = jax.block_until_ready(out)

    # Tight check against a reference with the kernel's bf16 MXU-operand rounding, plus
    # a looser check against the pure-f32 module math.
    ref_bf16 = cnn_reference(x, emb_w, conv_w, conv_b, fc_w, fc_b,
                             kernel_heights=kernel_heights, stride=stride,
                             padding=padding, mxu_dtype=jnp.bfloat16)
    ref_f32 = cnn_reference(x, emb_w, conv_w, conv_b, fc_w, fc_b,
                            kernel_heights=kernel_heights, stride=stride,
                            padding=padding, mxu_dtype=jnp.float32)

    assert out.shape == (B, output_size), out.shape
    assert jnp.allclose(out, ref_bf16, atol=1e-4, rtol=1e-4), (out, ref_bf16)
    assert jnp.allclose(out, ref_f32, atol=3e-2, rtol=3e-2), (out, ref_f32)
    print("KERNEL_OK")
</pallas_src>

<mosaic_0001>
module attributes {stable_mosaic.version = 11 : i64} {
  func.func @cnn_kernel(%arg0: i32, %arg1: memref<128x1xi32, #tpu.memory_space<vmem>>, %arg2: memref<128x128xbf16, #tpu.memory_space<vmem>>, %arg3: memref<128x128xbf16, #tpu.memory_space<vmem>>, %arg4: memref<1x128xf32, #tpu.memory_space<vmem>>, %arg5: memref<128x128xbf16, #tpu.memory_space<vmem>>, %arg6: memref<1x128xf32, #tpu.memory_space<vmem>>, %arg7: memref<8x128xf32, #tpu.memory_space<vmem>>) attributes {dimension_semantics = [#tpu.dimension_semantics<parallel>], iteration_bounds = array<i64: 1>, scalar_prefetch = 0 : i64, scratch_operands = 0 : i64, tpu.core_type = #tpu.core_type<tc>, window_params = [{transform_indices = @transform_0, window_bounds = array<i64: 128, 1>}, {pipeline_mode = #tpu.pipeline_mode<synchronous>, transform_indices = @transform_1, window_bounds = array<i64: 128, 128>}, {pipeline_mode = #tpu.pipeline_mode<synchronous>, transform_indices = @transform_2, window_bounds = array<i64: 128, 128>}, {pipeline_mode = #tpu.pipeline_mode<synchronous>, transform_indices = @transform_3, window_bounds = array<i64: 1, 128>}, {pipeline_mode = #tpu.pipeline_mode<synchronous>, transform_indices = @transform_4, window_bounds = array<i64: 128, 128>}, {pipeline_mode = #tpu.pipeline_mode<synchronous>, transform_indices = @transform_5, window_bounds = array<i64: 1, 128>}, {transform_indices = @transform_6, window_bounds = array<i64: 8, 128>}]} {
    %c0 = arith.constant 0 : index
    %c0_0 = arith.constant 0 : index
    %0 = vector.load %arg1[%c0, %c0_0] : memref<128x1xi32, #tpu.memory_space<vmem>>, vector<128x1xi32>
    %1 = tpu.iota {dimensions = array<i32: 1>} : vector<128x128xi32>
    %2 = vector.broadcast %0 : vector<128x1xi32> to vector<128x128xi32>
    %3 = arith.cmpi eq, %1, %2 : vector<128x128xi32>
    %cst = arith.constant 1.000000e+00 : f32
    %cst_1 = arith.constant 0.000000e+00 : f32
    %4 = vector.broadcast %cst : f32 to vector<128x128xf32>
    %5 = vector.broadcast %cst_1 : f32 to vector<128x128xf32>
    %6 = arith.select %3, %4, %5 : vector<128x128xi1>, vector<128x128xf32>
    %7 = arith.truncf %6 : vector<128x128xf32> to vector<128x128xbf16>
    %c0_2 = arith.constant 0 : index
    %c0_3 = arith.constant 0 : index
    %8 = vector.load %arg2[%c0_2, %c0_3] : memref<128x128xbf16, #tpu.memory_space<vmem>>, vector<128x128xbf16>
    %cst_4 = arith.constant dense<0.000000e+00> : vector<128x128xf32>
    %9 = tpu.matmul %7, %8, %cst_4 {dimension_numbers = #tpu.dot_dimension_numbers<[1], [0], [0], [1], [0, 0, 1, 1], [], []>} : vector<128x128xbf16>, vector<128x128xbf16>, vector<128x128xf32> -> vector<128x128xf32>
    %c127_i32 = arith.constant 127 : i32
    %10 = tpu.dynamic_rotate %9 by %c127_i32 dim 0 : vector<128x128xf32>, i32 -> vector<128x128xf32>
    %c16_i32 = arith.constant 16 : i32
    %11 = tpu.dynamic_rotate %10 by %c16_i32 dim 1 : vector<128x128xf32>, i32 -> vector<128x128xf32>
    %12 = arith.addf %9, %11 : vector<128x128xf32>
    %c126_i32 = arith.constant 126 : i32
    %13 = tpu.dynamic_rotate %9 by %c126_i32 dim 0 : vector<128x128xf32>, i32 -> vector<128x128xf32>
    %c32_i32 = arith.constant 32 : i32
    %14 = tpu.dynamic_rotate %13 by %c32_i32 dim 1 : vector<128x128xf32>, i32 -> vector<128x128xf32>
    %15 = arith.addf %12, %14 : vector<128x128xf32>
    %16 = arith.truncf %15 : vector<128x128xf32> to vector<128x128xbf16>
    %c0_5 = arith.constant 0 : index
    %c0_6 = arith.constant 0 : index
    %17 = vector.load %arg3[%c0_5, %c0_6] : memref<128x128xbf16, #tpu.memory_space<vmem>>, vector<128x128xbf16>
    %cst_7 = arith.constant dense<0.000000e+00> : vector<128x128xf32>
    %18 = tpu.matmul %16, %17, %cst_7 {dimension_numbers = #tpu.dot_dimension_numbers<[1], [0], [0], [1], [0, 0, 1, 1], [], []>} : vector<128x128xbf16>, vector<128x128xbf16>, vector<128x128xf32> -> vector<128x128xf32>
    %c0_8 = arith.constant 0 : index
    %c0_9 = arith.constant 0 : index
    %19 = vector.load %arg4[%c0_8, %c0_9] : memref<1x128xf32, #tpu.memory_space<vmem>>, vector<1x128xf32>
    %20 = vector.broadcast %19 : vector<1x128xf32> to vector<128x128xf32>
    %21 = arith.addf %18, %20 : vector<128x128xf32>
    %cst_10 = arith.constant 0.000000e+00 : f32
    %22 = vector.broadcast %cst_10 : f32 to vector<128x128xf32>
    %23 = arith.maximumf %21, %22 : vector<128x128xf32>
    %24 = vector.shape_cast %23 : vector<128x128xf32> to vector<8x16x128xf32>
    %25 = tpu.iota {dimensions = array<i32: 1>} : vector<8x16x128xi32>
    %c8_i32 = arith.constant 8 : i32
    %26 = vector.broadcast %c8_i32 : i32 to vector<8x16x128xi32>
    %27 = arith.cmpi slt, %25, %26 : vector<8x16x128xi32>
    %cst_11 = arith.constant 0.000000e+00 : f32
    %28 = vector.broadcast %cst_11 : f32 to vector<8x16x128xf32>
    %29 = arith.select %27, %24, %28 : vector<8x16x128xi1>, vector<8x16x128xf32>
    %cst_12 = arith.constant dense<0xFF800000> : vector<8x128xf32>
    %30 = vector.multi_reduction <maximumf>, %29, %cst_12 [1] : vector<8x16x128xf32> to vector<8x128xf32>
    %31 = arith.truncf %30 : vector<8x128xf32> to vector<8x128xbf16>
    %c0_13 = arith.constant 0 : index
    %c0_14 = arith.constant 0 : index
    %32 = vector.load %arg5[%c0_13, %c0_14] : memref<128x128xbf16, #tpu.memory_space<vmem>>, vector<128x128xbf16>
    %cst_15 = arith.constant dense<0.000000e+00> : vector<8x128xf32>
    %33 = tpu.matmul %31, %32, %cst_15 {dimension_numbers = #tpu.dot_dimension_numbers<[1], [0], [0], [1], [0, 0, 1, 1], [], []>} : vector<8x128xbf16>, vector<128x128xbf16>, vector<8x128xf32> -> vector<8x128xf32>
    %c0_16 = arith.constant 0 : index
    %c0_17 = arith.constant 0 : index
    %34 = vector.load %arg6[%c0_16, %c0_17] : memref<1x128xf32, #tpu.memory_space<vmem>>, vector<1x128xf32>
    %35 = vector.broadcast %34 : vector<1x128xf32> to vector<8x128xf32>
    %36 = arith.addf %33, %35 : vector<8x128xf32>
    %c0_18 = arith.constant 0 : index
    %c0_19 = arith.constant 0 : index
    %37 = vector.load %arg7[%c0_18, %c0_19] : memref<8x128xf32, #tpu.memory_space<vmem>>, vector<8x128xf32>
    tpu.vector_store %arg7[%c0_18, %c0_19], %36 {strides = array<i32>} : memref<8x128xf32, #tpu.memory_space<vmem>>, vector<8x128xf32>,
    return
  }
  func.func @transform_0(%arg0: i32) -> (i32, i32) {
    %c0_i32 = arith.constant 0 : i32
    %c0_i32_0 = arith.constant 0 : i32
    return %arg0, %c0_i32 : i32, i32
  }
  func.func @transform_1(%arg0: i32) -> (i32, i32) {
    %c0_i32 = arith.constant 0 : i32
    %c0_i32_0 = arith.constant 0 : i32
    %c0_i32_1 = arith.constant 0 : i32
    return %c0_i32, %c0_i32_0 : i32, i32
  }
  func.func @transform_2(%arg0: i32) -> (i32, i32) {
    %c0_i32 = arith.constant 0 : i32
    %c0_i32_0 = arith.constant 0 : i32
    %c0_i32_1 = arith.constant 0 : i32
    return %c0_i32, %c0_i32_0 : i32, i32
  }
  func.func @transform_3(%arg0: i32) -> (i32, i32) {
    %c0_i32 = arith.constant 0 : i32
    %c0_i32_0 = arith.constant 0 : i32
    %c0_i32_1 = arith.constant 0 : i32
    return %c0_i32, %c0_i32_0 : i32, i32
  }
  func.func @transform_4(%arg0: i32) -> (i32, i32) {
    %c0_i32 = arith.constant 0 : i32
    %c0_i32_0 = arith.constant 0 : i32
    %c0_i32_1 = arith.constant 0 : i32
    return %c0_i32, %c0_i32_0 : i32, i32
  }
  func.func @transform_5(%arg0: i32) -> (i32, i32) {
    %c0_i32 = arith.constant 0 : i32
    %c0_i32_0 = arith.constant 0 : i32
    %c0_i32_1 = arith.constant 0 : i32
    return %c0_i32, %c0_i32_0 : i32, i32
  }
  func.func @transform_6(%arg0: i32) -> (i32, i32) {
    %c0_i32 = arith.constant 0 : i32
    %c0_i32_0 = arith.constant 0 : i32
    return %arg0, %c0_i32 : i32, i32
  }
}

</mosaic_0001>

<llo_original>
// kernel: tpu_custom_call.1
$region0: #{tpu_custom_call.1}
  #allocation0 [shape = 'u32[]', space=smem, size = 0x4, offset = 0x4, fixed_abs, tag = 'smem constant byte address 0x4 - core index']
  #allocation1 [shape = 'u32[144,128]{1,0:T(1,128)}', space=vmem, size = 0x12000, scoped, tag = 'internal scratch']
  %s0 = inlined_call_operand.vmem [shape: s32[128,1], index: 0, kind: input, shape index: {}]
  %s1 = inlined_call_operand.vmem [shape: bf16[128,128], index: 1, kind: input, shape index: {}]
  %s2 = inlined_call_operand.vmem [shape: bf16[128,128], index: 2, kind: input, shape index: {}]
  %s3 = inlined_call_operand.vmem [shape: f32[1,128], index: 3, kind: input, shape index: {}]
  %s4 = inlined_call_operand.hbm [shape: bf16[128,128], index: 4, kind: input, shape index: {}]
  %s5 = inlined_call_operand.vmem [shape: f32[1,128], index: 5, kind: input, shape index: {}]
  %s6 = inlined_call_operand.hbm [shape: f32[8,128], index: 6, kind: output, shape index: {}]
  %s7 = sld [smem:[#allocation0]]
  $region38: #{tpu_custom_call.1} parent=0
    _
  %s9 = ssub.s32 1, %s7
  %s10 = scalar_select 0, %s9, %s7
  $region1: #{tpu_custom_call.1} parent=0
    #allocation2 [shape = 'u8[32768]{0}', space=vmem, size = 0x8000, scoped, tag = 'input window, operand 4, single buffered']
    #allocation3 [shape = 's32[1]{0}', space=sflag, size = 0x4, scoped, tag = 'scoped memory for tpu_custom_call.1']
    #allocation4 [shape = 's32[1]{0}', space=sflag, size = 0x4, scoped, tag = 'scoped memory for tpu_custom_call.1']
    #allocation5 [shape = 'u8[4096]{0}', space=vmem, size = 0x1000, scoped, tag = 'output window, operand 0, single buffered']
    %11 = vsyncpa [#allocation3], 0
    %12 = vsyncpa [#allocation4], 0
    // Predicated region
    $region2: #{tpu_custom_call.1} parent=1 // pred_check
      _
    $region3: #{tpu_custom_call.1} parent=1 // pred_check_branch
      %14 = sbr.rel (0) target = $region5
    $region4: #{tpu_custom_call.1} parent=1 // pred_region
      _
    $region5: #{tpu_custom_call.1} parent=1 // pred_fallthru
      _
    // Predicated region
    $region6: #{tpu_custom_call.1} parent=1 // pred_check
      _
    $region7: #{tpu_custom_call.1} parent=1 // pred_check_branch
      %16 = sbr.rel (0) target = $region9
    $region8: #{tpu_custom_call.1} parent=1 // pred_region
      _
    $region9: #{tpu_custom_call.1} parent=1 // pred_fallthru
      _
    // Predicated region
    $region10: #{tpu_custom_call.1} parent=1 // pred_check
      _
    $region11: #{tpu_custom_call.1} parent=1 // pred_check_branch
      %18 = sbr.rel (0) target = $region13
    $region12: #{tpu_custom_call.1} parent=1 // pred_region
      _
    $region13: #{tpu_custom_call.1} parent=1 // pred_fallthru
      _
    // Predicated region
    $region14: #{tpu_custom_call.1} parent=1 // pred_check
      _
    $region15: #{tpu_custom_call.1} parent=1 // pred_check_branch
      %20 = sbr.rel (0) target = $region17
    $region16: #{tpu_custom_call.1} parent=1 // pred_region
      _
    $region17: #{tpu_custom_call.1} parent=1 // pred_fallthru
      _
    // Predicated region
    $region18: #{tpu_custom_call.1} parent=1 // pred_check
      _
    $region19: #{tpu_custom_call.1} parent=1 // pred_check_branch
      %22 = sbr.rel (0) target = $region21
    $region20: #{tpu_custom_call.1} parent=1 // pred_region
      %s24 = ssub.s32 1024, 1024
      %25 = vsyncadd [#allocation3], %s24
      %s26 = sshll.u32 [#allocation2], 4
      %s27 = int_to_ptr.vmem [resolvable:$true] %s26
      %32 = dma.hbm_to_vmem [thread:$0]  %s4, 1024, %s27, [#allocation3], 64, 64, 4
    $region21: #{tpu_custom_call.1} parent=1 // pred_fallthru
      _
    // Predicated region
    $region22: #{tpu_custom_call.1} parent=1 // pred_check
      _
    $region23: #{tpu_custom_call.1} parent=1 // pred_check_branch
      %34 = sbr.rel (0) target = $region25
    $region24: #{tpu_custom_call.1} parent=1 // pred_region
      _
    $region25: #{tpu_custom_call.1} parent=1 // pred_fallthru
      _
    // Predicated region
    $region26: #{tpu_custom_call.1} parent=1 // pred_check
      _
    $region27: #{tpu_custom_call.1} parent=1 // pred_check_branch
      %36 = sbr.rel (0) target = $region29
    $region28: #{tpu_custom_call.1} parent=1 // pred_region
      %37 = dma.done [#allocation3], 1024
    $region29: #{tpu_custom_call.1} parent=1 // pred_fallthru
      _
    %v39 = vld [vmem:[%s0] sm:$0xff]
    %v40 = vld [vmem:[%s0 + $0x8] sm:$0xff]
    %v41 = vld [vmem:[%s0 + $0x10] sm:$0xff]
    %v42 = vld [vmem:[%s0 + $0x18] sm:$0xff]
    %v43 = vld [vmem:[%s0 + $0x20] sm:$0xff]
    %v44 = vld [vmem:[%s0 + $0x28] sm:$0xff]
    %v45 = vld [vmem:[%s0 + $0x30] sm:$0xff]
    %v46 = vld [vmem:[%s0 + $0x38] sm:$0xff]
    %v47 = vld [vmem:[%s0 + $0x40] sm:$0xff]
    %v48 = vld [vmem:[%s0 + $0x48] sm:$0xff]
    %v49 = vld [vmem:[%s0 + $0x50] sm:$0xff]
    %v50 = vld [vmem:[%s0 + $0x58] sm:$0xff]
    %v51 = vld [vmem:[%s0 + $0x60] sm:$0xff]
    %v52 = vld [vmem:[%s0 + $0x68] sm:$0xff]
    %v53 = vld [vmem:[%s0 + $0x70] sm:$0xff]
    %v54 = vld [vmem:[%s0 + $0x78] sm:$0xff]
    %v55 = vlaneseq
    %v56 = vand.u32 %v55, 127
    %57 = vset.pattern.permute.xlu0 0
    %58 = vperm.xlu0 %57, %v39
    %v59 = vpop.permute.xlu0 %58
    %60 = vset.pattern.permute.xlu0 0
    %61 = vperm.xlu0 %60, %v40
    %v62 = vpop.permute.xlu0 %61
    %63 = vset.pattern.permute.xlu0 0
    %64 = vperm.xlu0 %63, %v41
    %v65 = vpop.permute.xlu0 %64
    %66 = vset.pattern.permute.xlu0 0
    %67 = vperm.xlu0 %66, %v42
    %v68 = vpop.permute.xlu0 %67
    %69 = vset.pattern.permute.xlu0 0
    %70 = vperm.xlu0 %69, %v43
    %v71 = vpop.permute.xlu0 %70
    %72 = vset.pattern.permute.xlu0 0
    %73 = vperm.xlu0 %72, %v44
    %v74 = vpop.permute.xlu0 %73
    %75 = vset.pattern.permute.xlu0 0
    %76 = vperm.xlu0 %75, %v45
    %v77 = vpop.permute.xlu0 %76
    %78 = vset.pattern.permute.xlu0 0
    %79 = vperm.xlu0 %78, %v46
    %v80 = vpop.permute.xlu0 %79
    %81 = vset.pattern.permute.xlu0 0
    %82 = vperm.xlu0 %81, %v47
    %v83 = vpop.permute.xlu0 %82
    %84 = vset.pattern.permute.xlu0 0
    %85 = vperm.xlu0 %84, %v48
    %v86 = vpop.permute.xlu0 %85
    %87 = vset.pattern.permute.xlu0 0
    %88 = vperm.xlu0 %87, %v49
    %v89 = vpop.permute.xlu0 %88
    %90 = vset.pattern.permute.xlu0 0
    %91 = vperm.xlu0 %90, %v50
    %v92 = vpop.permute.xlu0 %91
    %93 = vset.pattern.permute.xlu0 0
    %94 = vperm.xlu0 %93, %v51
    %v95 = vpop.permute.xlu0 %94
    %96 = vset.pattern.permute.xlu0 0
    %97 = vperm.xlu0 %96, %v52
    %v98 = vpop.permute.xlu0 %97
    %99 = vset.pattern.permute.xlu0 0
    %100 = vperm.xlu0 %99, %v53
    %v101 = vpop.permute.xlu0 %100
    %102 = vset.pattern.permute.xlu0 0
    %103 = vperm.xlu0 %102, %v54
    %v104 = vpop.permute.xlu0 %103
    %vm105 = vcmp.eq.s32.totalorder %v56, %v59
    %vm106 = vcmp.eq.s32.totalorder %v56, %v62
    %vm107 = vcmp.eq.s32.totalorder %v56, %v65
    %vm108 = vcmp.eq.s32.totalorder %v56, %v68
    %vm109 = vcmp.eq.s32.totalorder %v56, %v71
    %vm110 = vcmp.eq.s32.totalorder %v56, %v74
    %vm111 = vcmp.eq.s32.totalorder %v56, %v77
    %vm112 = vcmp.eq.s32.totalorder %v56, %v80
    %vm113 = vcmp.eq.s32.totalorder %v56, %v83
    %vm114 = vcmp.eq.s32.totalorder %v56, %v86
    %vm115 = vcmp.eq.s32.totalorder %v56, %v89
    %vm116 = vcmp.eq.s32.totalorder %v56, %v92
    %vm117 = vcmp.eq.s32.totalorder %v56, %v95
    %vm118 = vcmp.eq.s32.totalorder %v56, %v98
    %vm119 = vcmp.eq.s32.totalorder %v56, %v101
    %vm120 = vcmp.eq.s32.totalorder %v56, %v104
    %v121 = vsel %vm105, 1.0, 0.0
    %v122 = vsel %vm106, 1.0, 0.0
    %v123 = vsel %vm107, 1.0, 0.0
    %v124 = vsel %vm108, 1.0, 0.0
    %v125 = vsel %vm109, 1.0, 0.0
    %v126 = vsel %vm110, 1.0, 0.0
    %v127 = vsel %vm111, 1.0, 0.0
    %v128 = vsel %vm112, 1.0, 0.0
    %v129 = vsel %vm113, 1.0, 0.0
    %v130 = vsel %vm114, 1.0, 0.0
    %v131 = vsel %vm115, 1.0, 0.0
    %v132 = vsel %vm116, 1.0, 0.0
    %v133 = vsel %vm117, 1.0, 0.0
    %v134 = vsel %vm118, 1.0, 0.0
    %v135 = vsel %vm119, 1.0, 0.0
    %v136 = vsel %vm120, 1.0, 0.0
    %v137 = vpack.c.bf16 %v122, %v121
    %v138 = vpack.c.bf16 %v124, %v123
    %v139 = vpack.c.bf16 %v126, %v125
    %v140 = vpack.c.bf16 %v128, %v127
    %v141 = vpack.c.bf16 %v130, %v129
    %v142 = vpack.c.bf16 %v132, %v131
    %v143 = vpack.c.bf16 %v134, %v133
    %v144 = vpack.c.bf16 %v136, %v135
    %v145 = vld [vmem:[%s1] sm:$0xf]
    %v146 = vld [vmem:[%s1 + $0x4] sm:$0xf]
    %v147 = vld [vmem:[%s1 + $0x8] sm:$0xf]
    %v148 = vld [vmem:[%s1 + $0xc] sm:$0xf]
    %v149 = vld [vmem:[%s1 + $0x10] sm:$0xf]
    %v150 = vld [vmem:[%s1 + $0x14] sm:$0xf]
    %v151 = vld [vmem:[%s1 + $0x18] sm:$0xf]
    %v152 = vld [vmem:[%s1 + $0x1c] sm:$0xf]
    %v153 = vld [vmem:[%s1 + $0x20] sm:$0xf]
    %v154 = vld [vmem:[%s1 + $0x24] sm:$0xf]
    %v155 = vld [vmem:[%s1 + $0x28] sm:$0xf]
    %v156 = vld [vmem:[%s1 + $0x2c] sm:$0xf]
    %v157 = vld [vmem:[%s1 + $0x30] sm:$0xf]
    %v158 = vld [vmem:[%s1 + $0x34] sm:$0xf]
    %v159 = vld [vmem:[%s1 + $0x38] sm:$0xf]
    %v160 = vld [vmem:[%s1 + $0x3c] sm:$0xf]
    %v177 = vunpack.c.l.b16 %v145
    %v178 = vunpack.c.l.b16 %v146
    %v179 = vunpack.c.l.b16 %v147
    %v180 = vunpack.c.l.b16 %v148
    %v181 = vunpack.c.l.b16 %v149
    %v182 = vunpack.c.l.b16 %v150
    %v183 = vunpack.c.l.b16 %v151
    %v184 = vunpack.c.l.b16 %v152
    %v185 = vunpack.c.l.b16 %v153
    %v186 = vunpack.c.l.b16 %v154
    %v187 = vunpack.c.l.b16 %v155
    %v188 = vunpack.c.l.b16 %v156
    %v189 = vunpack.c.l.b16 %v157
    %v190 = vunpack.c.l.b16 %v158
    %v191 = vunpack.c.l.b16 %v159
    %v192 = vunpack.c.l.b16 %v160
    %v193 = vpack.c.b16 %v178, %v177
    %v194 = vpack.c.b16 %v180, %v179
    %v195 = vpack.c.b16 %v182, %v181
    %v196 = vpack.c.b16 %v184, %v183
    %v197 = vpack.c.b16 %v186, %v185
    %v198 = vpack.c.b16 %v188, %v187
    %v199 = vpack.c.b16 %v190, %v189
    %v200 = vpack.c.b16 %v192, %v191
    %209 = vmatprep.subr.bf16.mxu0 0
    %210 = vmatpush1.bf16.msra.mxu0 %v193
    %211 = vmatprep.subr.bf16.mxu0 0
    %212 = vmatpush1.bf16.msra.mxu0 %v194
    %213 = vmatprep.subr.bf16.mxu0 0
    %214 = vmatpush1.bf16.msra.mxu0 %v195
    %215 = vmatprep.subr.bf16.mxu0 0
    %216 = vmatpush1.bf16.msra.mxu0 %v196
    %217 = vmatprep.subr.bf16.mxu0 0
    %218 = vmatpush1.bf16.msra.mxu0 %v197
    %219 = vmatprep.subr.bf16.mxu0 0
    %220 = vmatpush1.bf16.msra.mxu0 %v198
    %221 = vmatprep.subr.bf16.mxu0 0
    %222 = vmatpush1.bf16.msra.mxu0 %v199
    %223 = vmatprep.subr.bf16.mxu0 0
    %224 = vmatpush1.bf16.msra.mxu0 %v200
    %225 = vmatprep.subr.bf16.mxu0 0
    %226 = vmatpush1.bf16.msra.mxu0 0
    %227 = vmatprep.subr.bf16.mxu0 0
    %228 = vmatpush1.bf16.msra.mxu0 0
    %229 = vmatprep.subr.bf16.mxu0 0
    %230 = vmatpush1.bf16.msra.mxu0 0
    %231 = vmatprep.subr.bf16.mxu0 0
    %232 = vmatpush1.bf16.msra.mxu0 0
    %233 = vmatprep.subr.bf16.mxu0 0
    %234 = vmatpush1.bf16.msra.mxu0 0
    %235 = vmatprep.subr.bf16.mxu0 0
    %236 = vmatpush1.bf16.msra.mxu0 0
    %237 = vmatprep.subr.bf16.mxu0 0
    %238 = vmatpush1.bf16.msra.mxu0 0
    %239 = vmatprep.subr.bf16.mxu0 0
    %240 = vmatpush1.bf16.msra.mxu0 0
    %241 = vmatprep.mubr.bf16.mxu0 0
    %242 = vmatmul.mubr.bf16.gmra.mrb[0].mxu0 %v137
    %v243 = vpop.f32.mrb[0].mxu0
    %v244 = vadd.f32 0.0, %v243
    %v245 = vpop.f32.mrb[0].mxu0
    %v246 = vpop.f32.mrb[0].mxu0
    %v247 = vadd.f32 0.0, %v246
    %v248 = vpop.f32.mrb[0].mxu0
    %249 = vmatprep.mubr.bf16.mxu0 0
    %250 = vmatmul.mubr.bf16.gmra.mrb[0].mxu0 %v138
    %v251 = vpop.f32.mrb[0].mxu0
    %v252 = vadd.f32 0.0, %v251
    %v253 = vpop.f32.mrb[0].mxu0
    %v254 = vpop.f32.mrb[0].mxu0
    %v255 = vadd.f32 0.0, %v254
    %v256 = vpop.f32.mrb[0].mxu0
    %257 = vmatprep.mubr.bf16.mxu0 0
    %258 = vmatmul.mubr.bf16.gmra.mrb[0].mxu0 %v139
    %v259 = vpop.f32.mrb[0].mxu0
    %v260 = vadd.f32 0.0, %v259
    %v261 = vpop.f32.mrb[0].mxu0
    %v262 = vpop.f32.mrb[0].mxu0
    %v263 = vadd.f32 0.0, %v262
    %v264 = vpop.f32.mrb[0].mxu0
    %265 = vmatprep.mubr.bf16.mxu0 0
    %266 = vmatmul.mubr.bf16.gmra.mrb[0].mxu0 %v140
    %v267 = vpop.f32.mrb[0].mxu0
    %v268 = vadd.f32 0.0, %v267
    %v269 = vpop.f32.mrb[0].mxu0
    %v270 = vpop.f32.mrb[0].mxu0
    %v271 = vadd.f32 0.0, %v270
    %v272 = vpop.f32.mrb[0].mxu0
    %273 = vmatprep.mubr.bf16.mxu0 0
    %274 = vmatmul.mubr.bf16.gmra.mrb[0].mxu0 %v141
    %v275 = vpop.f32.mrb[0].mxu0
    %v276 = vadd.f32 0.0, %v275
    %v277 = vpop.f32.mrb[0].mxu0
    %v278 = vpop.f32.mrb[0].mxu0
    %v279 = vadd.f32 0.0, %v278
    %v280 = vpop.f32.mrb[0].mxu0
    %281 = vmatprep.mubr.bf16.mxu0 0
    %282 = vmatmul.mubr.bf16.gmra.mrb[0].mxu0 %v142
    %v283 = vpop.f32.mrb[0].mxu0
    %v284 = vadd.f32 0.0, %v283
    %v285 = vpop.f32.mrb[0].mxu0
    %v286 = vpop.f32.mrb[0].mxu0
    %v287 = vadd.f32 0.0, %v286
    %v288 = vpop.f32.mrb[0].mxu0
    %289 = vmatprep.mubr.bf16.mxu0 0
    %290 = vmatmul.mubr.bf16.gmra.mrb[0].mxu0 %v143
    %v291 = vpop.f32.mrb[0].mxu0
    %v292 = vadd.f32 0.0, %v291
    %v293 = vpop.f32.mrb[0].mxu0
    %v294 = vpop.f32.mrb[0].mxu0
    %v295 = vadd.f32 0.0, %v294
    %v296 = vpop.f32.mrb[0].mxu0
    %297 = vmatprep.mubr.bf16.mxu0 0
    %298 = vmatmul.mubr.bf16.gmra.mrb[0].mxu0 %v144
    %v299 = vpop.f32.mrb[0].mxu0
    %v300 = vadd.f32 0.0, %v299
    %v301 = vpop.f32.mrb[0].mxu0
    %v302 = vpop.f32.mrb[0].mxu0
    %v303 = vadd.f32 0.0, %v302
    %v304 = vpop.f32.mrb[0].mxu0
    %305 = vdwg.mxu0
    %v306 = vrot.slane %v244, 1
    %v307 = vrot.slane %v247, 1
    %v308 = vrot.slane %v252, 1
    %v309 = vrot.slane %v255, 1
    %v310 = vrot.slane %v260, 1
    %v311 = vrot.slane %v263, 1
    %v312 = vrot.slane %v268, 1
    %v313 = vrot.slane %v271, 1
    %v314 = vrot.slane %v276, 1
    %v315 = vrot.slane %v279, 1
    %v316 = vrot.slane %v284, 1
    %v317 = vrot.slane %v287, 1
    %v318 = vrot.slane %v292, 1
    %v319 = vrot.slane %v295, 1
    %v320 = vrot.slane %v300, 1
    %v321 = vrot.slane %v303, 1
    %v322 = vlaneseq
    %v323 = vshrl.u32 %v322, 7
    %vm324 = vcmp.lt.s32.totalorder %v323, 7
    %v325 = vsel %vm324, %v320, %v321
    %v326 = vsel %vm324, %v319, %v320
    %v327 = vsel %vm324, %v318, %v319
    %v328 = vsel %vm324, %v317, %v318
    %v329 = vsel %vm324, %v316, %v317
    %v330 = vsel %vm324, %v315, %v316
    %v331 = vsel %vm324, %v314, %v315
    %v332 = vsel %vm324, %v313, %v314
    %v333 = vsel %vm324, %v312, %v313
    %v334 = vsel %vm324, %v311, %v312
    %v335 = vsel %vm324, %v310, %v311
    %v336 = vsel %vm324, %v309, %v310
    %v337 = vsel %vm324, %v308, %v309
    %v338 = vsel %vm324, %v307, %v308
    %v339 = vsel %vm324, %v306, %v307
    %v340 = vsel %vm324, %v321, %v306
    %341 = vrot.lane.b32.xlu0 %v339, 16
    %v342 = vpop.permute.xlu0 %341
    %343 = vrot.lane.b32.xlu0 %v338, 16
    %v344 = vpop.permute.xlu0 %343
    %345 = vrot.lane.b32.xlu0 %v337, 16
    %v346 = vpop.permute.xlu0 %345
    %347 = vrot.lane.b32.xlu0 %v336, 16
    %v348 = vpop.permute.xlu0 %347
    %349 = vrot.lane.b32.xlu0 %v335, 16
    %v350 = vpop.permute.xlu0 %349
    %351 = vrot.lane.b32.xlu0 %v334, 16
    %v352 = vpop.permute.xlu0 %351
    %353 = vrot.lane.b32.xlu0 %v333, 16
    %v354 = vpop.permute.xlu0 %353
    %355 = vrot.lane.b32.xlu0 %v332, 16
    %v356 = vpop.permute.xlu0 %355
    %357 = vrot.lane.b32.xlu0 %v331, 16
    %v358 = vpop.permute.xlu0 %357
    %359 = vrot.lane.b32.xlu0 %v330, 16
    %v360 = vpop.permute.xlu0 %359
    %361 = vrot.lane.b32.xlu0 %v329, 16
    %v362 = vpop.permute.xlu0 %361
    %363 = vrot.lane.b32.xlu0 %v328, 16
    %v364 = vpop.permute.xlu0 %363
    %365 = vrot.lane.b32.xlu0 %v327, 16
    %v366 = vpop.permute.xlu0 %365
    %367 = vrot.lane.b32.xlu0 %v326, 16
    %v368 = vpop.permute.xlu0 %367
    %369 = vrot.lane.b32.xlu0 %v325, 16
    %v370 = vpop.permute.xlu0 %369
    %371 = vrot.lane.b32.xlu0 %v340, 16
    %v372 = vpop.permute.xlu0 %371
    %v373 = vadd.f32 %v244, %v342
    %v374 = vadd.f32 %v247, %v344
    %v375 = vadd.f32 %v252, %v346
    %v376 = vadd.f32 %v255, %v348
    %v377 = vadd.f32 %v260, %v350
    %v378 = vadd.f32 %v263, %v352
    %v379 = vadd.f32 %v268, %v354
    %v380 = vadd.f32 %v271, %v356
    %v381 = vadd.f32 %v276, %v358
    %v382 = vadd.f32 %v279, %v360
    %v383 = vadd.f32 %v284, %v362
    %v384 = vadd.f32 %v287, %v364
    %v385 = vadd.f32 %v292, %v366
    %v386 = vadd.f32 %v295, %v368
    %v387 = vadd.f32 %v300, %v370
    %v388 = vadd.f32 %v303, %v372
    %v389 = vrot.slane %v244, 2
    %v390 = vrot.slane %v247, 2
    %v391 = vrot.slane %v252, 2
    %v392 = vrot.slane %v255, 2
    %v393 = vrot.slane %v260, 2
    %v394 = vrot.slane %v263, 2
    %v395 = vrot.slane %v268, 2
    %v396 = vrot.slane %v271, 2
    %v397 = vrot.slane %v276, 2
    %v398 = vrot.slane %v279, 2
    %v399 = vrot.slane %v284, 2
    %v400 = vrot.slane %v287, 2
    %v401 = vrot.slane %v292, 2
    %v402 = vrot.slane %v295, 2
    %v403 = vrot.slane %v300, 2
    %v404 = vrot.slane %v303, 2
    %vm405 = vcmp.lt.s32.totalorder %v323, 6
    %v406 = vsel %vm405, %v403, %v404
    %v407 = vsel %vm405, %v402, %v403
    %v408 = vsel %vm405, %v401, %v402
    %v409 = vsel %vm405, %v400, %v401
    %v410 = vsel %vm405, %v399, %v400
    %v411 = vsel %vm405, %v398, %v399
    %v412 = vsel %vm405, %v397, %v398
    %v413 = vsel %vm405, %v396, %v397
    %v414 = vsel %vm405, %v395, %v396
    %v415 = vsel %vm405, %v394, %v395
    %v416 = vsel %vm405, %v393, %v394
    %v417 = vsel %vm405, %v392, %v393
    %v418 = vsel %vm405, %v391, %v392
    %v419 = vsel %vm405, %v390, %v391
    %v420 = vsel %vm405, %v389, %v390
    %v421 = vsel %vm405, %v404, %v389
    %422 = vrot.lane.b32.xlu0 %v420, 32
    %v423 = vpop.permute.xlu0 %422
    %424 = vrot.lane.b32.xlu0 %v419, 32
    %v425 = vpop.permute.xlu0 %424
    %426 = vrot.lane.b32.xlu0 %v418, 32
    %v427 = vpop.permute.xlu0 %426
    %428 = vrot.lane.b32.xlu0 %v417, 32
    %v429 = vpop.permute.xlu0 %428
    %430 = vrot.lane.b32.xlu0 %v416, 32
    %v431 = vpop.permute.xlu0 %430
    %432 = vrot.lane.b32.xlu0 %v415, 32
    %v433 = vpop.permute.xlu0 %432
    %434 = vrot.lane.b32.xlu0 %v414, 32
    %v435 = vpop.permute.xlu0 %434
    %436 = vrot.lane.b32.xlu0 %v413, 32
    %v437 = vpop.permute.xlu0 %436
    %438 = vrot.lane.b32.xlu0 %v412, 32
    %v439 = vpop.permute.xlu0 %438
    %440 = vrot.lane.b32.xlu0 %v411, 32
    %v441 = vpop.permute.xlu0 %440
    %442 = vrot.lane.b32.xlu0 %v410, 32
    %v443 = vpop.permute.xlu0 %442
    %444 = vrot.lane.b32.xlu0 %v409, 32
    %v445 = vpop.permute.xlu0 %444
    %446 = vrot.lane.b32.xlu0 %v408, 32
    %v447 = vpop.permute.xlu0 %446
    %448 = vrot.lane.b32.xlu0 %v407, 32
    %v449 = vpop.permute.xlu0 %448
    %450 = vrot.lane.b32.xlu0 %v406, 32
    %v451 = vpop.permute.xlu0 %450
    %452 = vrot.lane.b32.xlu0 %v421, 32
    %v453 = vpop.permute.xlu0 %452
    %v454 = vadd.f32 %v373, %v423
    %v455 = vadd.f32 %v374, %v425
    %v456 = vadd.f32 %v375, %v427
    %v457 = vadd.f32 %v376, %v429
    %v458 = vadd.f32 %v377, %v431
    %v459 = vadd.f32 %v378, %v433
    %v460 = vadd.f32 %v379, %v435
    %v461 = vadd.f32 %v380, %v437
    %v462 = vadd.f32 %v381, %v439
    %v463 = vadd.f32 %v382, %v441
    %v464 = vadd.f32 %v383, %v443
    %v465 = vadd.f32 %v384, %v445
    %v466 = vadd.f32 %v385, %v447
    %v467 = vadd.f32 %v386, %v449
    %v468 = vadd.f32 %v387, %v451
    %v469 = vadd.f32 %v388, %v453
    %v470 = vpack.c.bf16 %v455, %v454
    %v471 = vpack.c.bf16 %v457, %v456
    %v472 = vpack.c.bf16 %v459, %v458
    %v473 = vpack.c.bf16 %v461, %v460
    %v474 = vpack.c.bf16 %v463, %v462
    %v475 = vpack.c.bf16 %v465, %v464
    %v476 = vpack.c.bf16 %v467, %v466
    %v477 = vpack.c.bf16 %v469, %v468
    %v478 = vld [vmem:[%s2] sm:$0xf]
    %v479 = vld [vmem:[%s2 + $0x4] sm:$0xf]
    %v480 = vld [vmem:[%s2 + $0x8] sm:$0xf]
    %v481 = vld [vmem:[%s2 + $0xc] sm:$0xf]
    %v482 = vld [vmem:[%s2 + $0x10] sm:$0xf]
    %v483 = vld [vmem:[%s2 + $0x14] sm:$0xf]
    %v484 = vld [vmem:[%s2 + $0x18] sm:$0xf]
    %v485 = vld [vmem:[%s2 + $0x1c] sm:$0xf]
    %v486 = vld [vmem:[%s2 + $0x20] sm:$0xf]
    %v487 = vld [vmem:[%s2 + $0x24] sm:$0xf]
    %v488 = vld [vmem:[%s2 + $0x28] sm:$0xf]
    %v489 = vld [vmem:[%s2 + $0x2c] sm:$0xf]
    %v490 = vld [vmem:[%s2 + $0x30] sm:$0xf]
    %v491 = vld [vmem:[%s2 + $0x34] sm:$0xf]
    %v492 = vld [vmem:[%s2 + $0x38] sm:$0xf]
    %v493 = vld [vmem:[%s2 + $0x3c] sm:$0xf]
    %v494 = vld [vmem:[%s3] sm:$0x1]
    %v496 = vlaneseq
    %v497 = vshrl.u32 %v496, 7
    %v498 = vsub.s32 0, %v497
    %v499 = vrot.slane %v494, %v498
    %v517 = vunpack.c.l.b16 %v478
    %v518 = vunpack.c.l.b16 %v479
    %v519 = vunpack.c.l.b16 %v480
    %v520 = vunpack.c.l.b16 %v481
    %v521 = vunpack.c.l.b16 %v482
    %v522 = vunpack.c.l.b16 %v483
    %v523 = vunpack.c.l.b16 %v484
    %v524 = vunpack.c.l.b16 %v485
    %v525 = vunpack.c.l.b16 %v486
    %v526 = vunpack.c.l.b16 %v487
    %v527 = vunpack.c.l.b16 %v488
    %v528 = vunpack.c.l.b16 %v489
    %v529 = vunpack.c.l.b16 %v490
    %v530 = vunpack.c.l.b16 %v491
    %v531 = vunpack.c.l.b16 %v492
    %v532 = vunpack.c.l.b16 %v493
    %v533 = vpack.c.b16 %v518, %v517
    %v534 = vpack.c.b16 %v520, %v519
    %v535 = vpack.c.b16 %v522, %v521
    %v536 = vpack.c.b16 %v524, %v523
    %v537 = vpack.c.b16 %v526, %v525
    %v538 = vpack.c.b16 %v528, %v527
    %v539 = vpack.c.b16 %v530, %v529
    %v540 = vpack.c.b16 %v532, %v531
    %549 = vmatprep.subr.bf16.mxu0 0
    %550 = vmatpush1.bf16.msra.mxu0 %v533
    %551 = vmatprep.subr.bf16.mxu0 0
    %552 = vmatpush1.bf16.msra.mxu0 %v534
    %553 = vmatprep.subr.bf16.mxu0 0
    %554 = vmatpush1.bf16.msra.mxu0 %v535
    %555 = vmatprep.subr.bf16.mxu0 0
    %556 = vmatpush1.bf16.msra.mxu0 %v536
    %557 = vmatprep.subr.bf16.mxu0 0
    %558 = vmatpush1.bf16.msra.mxu0 %v537
    %559 = vmatprep.subr.bf16.mxu0 0
    %560 = vmatpush1.bf16.msra.mxu0 %v538
    %561 = vmatprep.subr.bf16.mxu0 0
    %562 = vmatpush1.bf16.msra.mxu0 %v539
    %563 = vmatprep.subr.bf16.mxu0 0
    %564 = vmatpush1.bf16.msra.mxu0 %v540
    %565 = vmatprep.subr.bf16.mxu0 0
    %566 = vmatpush1.bf16.msra.mxu0 0
    %567 = vmatprep.subr.bf16.mxu0 0
    %568 = vmatpush1.bf16.msra.mxu0 0
    %569 = vmatprep.subr.bf16.mxu0 0
    %570 = vmatpush1.bf16.msra.mxu0 0
    %571 = vmatprep.subr.bf16.mxu0 0
    %572 = vmatpush1.bf16.msra.mxu0 0
    %573 = vmatprep.subr.bf16.mxu0 0
    %574 = vmatpush1.bf16.msra.mxu0 0
    %575 = vmatprep.subr.bf16.mxu0 0
    %576 = vmatpush1.bf16.msra.mxu0 0
    %577 = vmatprep.subr.bf16.mxu0 0
    %578 = vmatpush1.bf16.msra.mxu0 0
    %579 = vmatprep.subr.bf16.mxu0 0
    %580 = vmatpush1.bf16.msra.mxu0 0
    %581 = vmatprep.mubr.bf16.mxu0 0
    %582 = vmatmul.mubr.bf16.gmra.mrb[0].mxu0 %v470
    %v583 = vpop.f32.mrb[0].mxu0
    %v584 = vadd.f32 %v499, %v583
    %v585 = vpop.f32.mrb[0].mxu0
    %v586 = vpop.f32.mrb[0].mxu0
    %v587 = vadd.f32 %v499, %v586
    %v588 = vpop.f32.mrb[0].mxu0
    %589 = vmatprep.mubr.bf16.mxu0 0
    %590 = vmatmul.mubr.bf16.gmra.mrb[0].mxu0 %v471
    %v591 = vpop.f32.mrb[0].mxu0
    %v592 = vadd.f32 %v499, %v591
    %v593 = vpop.f32.mrb[0].mxu0
    %v594 = vpop.f32.mrb[0].mxu0
    %v595 = vadd.f32 %v499, %v594
    %v596 = vpop.f32.mrb[0].mxu0
    %597 = vmatprep.mubr.bf16.mxu0 0
    %598 = vmatmul.mubr.bf16.gmra.mrb[0].mxu0 %v472
    %v599 = vpop.f32.mrb[0].mxu0
    %v600 = vadd.f32 %v499, %v599
    %v601 = vpop.f32.mrb[0].mxu0
    %v602 = vpop.f32.mrb[0].mxu0
    %v603 = vadd.f32 %v499, %v602
    %v604 = vpop.f32.mrb[0].mxu0
    %605 = vmatprep.mubr.bf16.mxu0 0
    %606 = vmatmul.mubr.bf16.gmra.mrb[0].mxu0 %v473
    %v607 = vpop.f32.mrb[0].mxu0
    %v608 = vadd.f32 %v499, %v607
    %v609 = vpop.f32.mrb[0].mxu0
    %v610 = vpop.f32.mrb[0].mxu0
    %v611 = vadd.f32 %v499, %v610
    %v612 = vpop.f32.mrb[0].mxu0
    %613 = vmatprep.mubr.bf16.mxu0 0
    %614 = vmatmul.mubr.bf16.gmra.mrb[0].mxu0 %v474
    %v615 = vpop.f32.mrb[0].mxu0
    %v616 = vadd.f32 %v499, %v615
    %v617 = vpop.f32.mrb[0].mxu0
    %v618 = vpop.f32.mrb[0].mxu0
    %v619 = vadd.f32 %v499, %v618
    %v620 = vpop.f32.mrb[0].mxu0
    %621 = vmatprep.mubr.bf16.mxu0 0
    %622 = vmatmul.mubr.bf16.gmra.mrb[0].mxu0 %v475
    %v623 = vpop.f32.mrb[0].mxu0
    %v624 = vadd.f32 %v499, %v623
    %v625 = vpop.f32.mrb[0].mxu0
    %v626 = vpop.f32.mrb[0].mxu0
    %v627 = vadd.f32 %v499, %v626
    %v628 = vpop.f32.mrb[0].mxu0
    %629 = vmatprep.mubr.bf16.mxu0 0
    %630 = vmatmul.mubr.bf16.gmra.mrb[0].mxu0 %v476
    %v631 = vpop.f32.mrb[0].mxu0
    %v632 = vadd.f32 %v499, %v631
    %v633 = vpop.f32.mrb[0].mxu0
    %v634 = vpop.f32.mrb[0].mxu0
    %v635 = vadd.f32 %v499, %v634
    %v636 = vpop.f32.mrb[0].mxu0
    %637 = vmatprep.mubr.bf16.mxu0 0
    %638 = vmatmul.mubr.bf16.gmra.mrb[0].mxu0 %v477
    %v639 = vpop.f32.mrb[0].mxu0
    %v640 = vadd.f32 %v499, %v639
    %v641 = vpop.f32.mrb[0].mxu0
    %v642 = vpop.f32.mrb[0].mxu0
    %v643 = vadd.f32 %v499, %v642
    %v644 = vpop.f32.mrb[0].mxu0
    %645 = vdwg.mxu0
    %v646 = vmax.f32 %v584, 0.0
    %v647 = vmax.f32 %v587, 0.0
    %v648 = vmax.f32 %v592, 0.0
    %v649 = vmax.f32 %v595, 0.0
    %v650 = vmax.f32 %v600, 0.0
    %v651 = vmax.f32 %v603, 0.0
    %v652 = vmax.f32 %v608, 0.0
    %v653 = vmax.f32 %v611, 0.0
    %v654 = vmax.f32 %v616, 0.0
    %v655 = vmax.f32 %v619, 0.0
    %v656 = vmax.f32 %v624, 0.0
    %v657 = vmax.f32 %v627, 0.0
    %v658 = vmax.f32 %v632, 0.0
    %v659 = vmax.f32 %v635, 0.0
    %v660 = vmax.f32 %v640, 0.0
    %v661 = vmax.f32 %v643, 0.0
    %v662 = vadd.s32 %v323, 8
    %vm663 = vcmp.lt.s32.totalorder %v323, 8
    %vm664 = vcmp.lt.s32.totalorder %v662, 8
    %v665 = vsel %vm663, %v646, 0.0
    %v666 = vsel %vm664, %v647, 0.0
    %v667 = vsel %vm663, %v648, 0.0
    %v668 = vsel %vm664, %v649, 0.0
    %v669 = vsel %vm663, %v650, 0.0
    %v670 = vsel %vm664, %v651, 0.0
    %v671 = vsel %vm663, %v652, 0.0
    %v672 = vsel %vm664, %v653, 0.0
    %v673 = vsel %vm663, %v654, 0.0
    %v674 = vsel %vm664, %v655, 0.0
    %v675 = vsel %vm663, %v656, 0.0
    %v676 = vsel %vm664, %v657, 0.0
    %v677 = vsel %vm663, %v658, 0.0
    %v678 = vsel %vm664, %v659, 0.0
    %v679 = vsel %vm663, %v660, 0.0
    %v680 = vsel %vm664, %v661, 0.0
    %v681 = vmax.f32 %v665, %v666
    %v682 = vrot.slane %v681, 4
    %v683 = vmax.f32 %v681, %v682
    %v684 = vrot.slane %v683, 2
    %v685 = vmax.f32 %v683, %v684
    %v686 = vrot.slane %v685, 1
    %v687 = vmax.f32 %v685, %v686
    %v688 = vmax.f32 %v667, %v668
    %v689 = vrot.slane %v688, 4
    %v690 = vmax.f32 %v688, %v689
    %v691 = vrot.slane %v690, 2
    %v692 = vmax.f32 %v690, %v691
    %v693 = vrot.slane %v692, 1
    %v694 = vmax.f32 %v692, %v693
    %v695 = vmax.f32 %v669, %v670
    %v696 = vrot.slane %v695, 4
    %v697 = vmax.f32 %v695, %v696
    %v698 = vrot.slane %v697, 2
    %v699 = vmax.f32 %v697, %v698
    %v700 = vrot.slane %v699, 1
    %v701 = vmax.f32 %v699, %v700
    %v702 = vmax.f32 %v671, %v672
    %v703 = vrot.slane %v702, 4
    %v704 = vmax.f32 %v702, %v703
    %v705 = vrot.slane %v704, 2
    %v706 = vmax.f32 %v704, %v705
    %v707 = vrot.slane %v706, 1
    %v708 = vmax.f32 %v706, %v707
    %v709 = vmax.f32 %v673, %v674
    %v710 = vrot.slane %v709, 4
    %v711 = vmax.f32 %v709, %v710
    %v712 = vrot.slane %v711, 2
    %v713 = vmax.f32 %v711, %v712
    %v714 = vrot.slane %v713, 1
    %v715 = vmax.f32 %v713, %v714
    %v716 = vmax.f32 %v675, %v676
    %v717 = vrot.slane %v716, 4
    %v718 = vmax.f32 %v716, %v717
    %v719 = vrot.slane %v718, 2
    %v720 = vmax.f32 %v718, %v719
    %v721 = vrot.slane %v720, 1
    %v722 = vmax.f32 %v720, %v721
    %v723 = vmax.f32 %v677, %v678
    %v724 = vrot.slane %v723, 4
    %v725 = vmax.f32 %v723, %v724
    %v726 = vrot.slane %v725, 2
    %v727 = vmax.f32 %v725, %v726
    %v728 = vrot.slane %v727, 1
    %v729 = vmax.f32 %v727, %v728
    %v730 = vmax.f32 %v679, %v680
    %v731 = vrot.slane %v730, 4
    %v732 = vmax.f32 %v730, %v731
    %v733 = vrot.slane %v732, 2
    %v734 = vmax.f32 %v732, %v733
    %v735 = vrot.slane %v734, 1
    %v736 = vmax.f32 %v734, %v735
    %v737 = vpack.c.bf16 %v687, %v687
    %v738 = vpack.c.bf16 %v694, %v694
    %v739 = vpack.c.bf16 %v701, %v701
    %v740 = vpack.c.bf16 %v708, %v708
    %v741 = vpack.c.bf16 %v715, %v715
    %v742 = vpack.c.bf16 %v722, %v722
    %v743 = vpack.c.bf16 %v729, %v729
    %v744 = vpack.c.bf16 %v736, %v736
    %v745 = vld [vmem:[#allocation2] sm:$0xf]
    %v746 = vld [vmem:[#allocation2 + $0x4] sm:$0xf]
    %v747 = vld [vmem:[#allocation2 + $0x8] sm:$0xf]
    %v748 = vld [vmem:[#allocation2 + $0xc] sm:$0xf]
    %v749 = vld [vmem:[#allocation2 + $0x10] sm:$0xf]
    %v750 = vld [vmem:[#allocation2 + $0x14] sm:$0xf]
    %v751 = vld [vmem:[#allocation2 + $0x18] sm:$0xf]
    %v752 = vld [vmem:[#allocation2 + $0x1c] sm:$0xf]
    %v753 = vld [vmem:[#allocation2 + $0x20] sm:$0xf]
    %v754 = vld [vmem:[#allocation2 + $0x24] sm:$0xf]
    %v755 = vld [vmem:[#allocation2 + $0x28] sm:$0xf]
    %v756 = vld [vmem:[#allocation2 + $0x2c] sm:$0xf]
    %v757 = vld [vmem:[#allocation2 + $0x30] sm:$0xf]
    %v758 = vld [vmem:[#allocation2 + $0x34] sm:$0xf]
    %v759 = vld [vmem:[#allocation2 + $0x38] sm:$0xf]
    %v760 = vld [vmem:[#allocation2 + $0x3c] sm:$0xf]
    %v761 = vld [vmem:[%s5] sm:$0x1]
    %v763 = vlaneseq
    %v764 = vshrl.u32 %v763, 7
    %v765 = vsub.s32 0, %v764
    %v766 = vrot.slane %v761, %v765
    %v776 = vunpack.c.l.b16 %v737
    %v777 = vunpack.c.l.b16 %v738
    %v778 = vunpack.c.l.b16 %v739
    %v779 = vunpack.c.l.b16 %v740
    %v780 = vunpack.c.l.b16 %v741
    %v781 = vunpack.c.l.b16 %v742
    %v782 = vunpack.c.l.b16 %v743
    %v783 = vunpack.c.l.b16 %v744
    %vm784 = vcmask 1041409
    %v785 = vsel %vm784, %v777, %v776
    %vm786 = vcmask 1042434
    %v787 = vsel %vm786, %v778, %v785
    %vm788 = vcmask 1043459
    %v789 = vsel %vm788, %v779, %v787
    %vm790 = vcmask 1044484
    %v791 = vsel %vm790, %v780, %v789
    %vm792 = vcmask 1045509
    %v793 = vsel %vm792, %v781, %v791
    %vm794 = vcmask 1046534
    %v795 = vsel %vm794, %v782, %v793
    %vm796 = vcmask 1047559
    %v797 = vsel %vm796, %v783, %v795
    %v798 = vpack.c.b16 %v797, %v797
    %v816 = vunpack.c.l.b16 %v745
    %v817 = vunpack.c.l.b16 %v746
    %v818 = vunpack.c.l.b16 %v747
    %v819 = vunpack.c.l.b16 %v748
    %v820 = vunpack.c.l.b16 %v749
    %v821 = vunpack.c.l.b16 %v750
    %v822 = vunpack.c.l.b16 %v751
    %v823 = vunpack.c.l.b16 %v752
    %v824 = vunpack.c.l.b16 %v753
    %v825 = vunpack.c.l.b16 %v754
    %v826 = vunpack.c.l.b16 %v755
    %v827 = vunpack.c.l.b16 %v756
    %v828 = vunpack.c.l.b16 %v757
    %v829 = vunpack.c.l.b16 %v758
    %v830 = vunpack.c.l.b16 %v759
    %v831 = vunpack.c.l.b16 %v760
    %v832 = vpack.c.b16 %v817, %v816
    %v833 = vpack.c.b16 %v819, %v818
    %v834 = vpack.c.b16 %v821, %v820
    %v835 = vpack.c.b16 %v823, %v822
    %v836 = vpack.c.b16 %v825, %v824
    %v837 = vpack.c.b16 %v827, %v826
    %v838 = vpack.c.b16 %v829, %v828
    %v839 = vpack.c.b16 %v831, %v830
    %848 = vmatprep.subr.bf16.mxu0 0
    %849 = vmatpush1.bf16.msra.mxu0 %v832
    %850 = vmatprep.subr.bf16.mxu0 0
    %851 = vmatpush1.bf16.msra.mxu0 %v833
    %852 = vmatprep.subr.bf16.mxu0 0
    %853 = vmatpush1.bf16.msra.mxu0 %v834
    %854 = vmatprep.subr.bf16.mxu0 0
    %855 = vmatpush1.bf16.msra.mxu0 %v835
    %856 = vmatprep.subr.bf16.mxu0 0
    %857 = vmatpush1.bf16.msra.mxu0 %v836
    %858 = vmatprep.subr.bf16.mxu0 0
    %859 = vmatpush1.bf16.msra.mxu0 %v837
    %860 = vmatprep.subr.bf16.mxu0 0
    %861 = vmatpush1.bf16.msra.mxu0 %v838
    %862 = vmatprep.subr.bf16.mxu0 0
    %863 = vmatpush1.bf16.msra.mxu0 %v839
    %864 = vmatprep.subr.bf16.mxu0 0
    %865 = vmatpush1.bf16.msra.mxu0 0
    %866 = vmatprep.subr.bf16.mxu0 0
    %867 = vmatpush1.bf16.msra.mxu0 0
    %868 = vmatprep.subr.bf16.mxu0 0
    %869 = vmatpush1.bf16.msra.mxu0 0
    %870 = vmatprep.subr.bf16.mxu0 0
    %871 = vmatpush1.bf16.msra.mxu0 0
    %872 = vmatprep.subr.bf16.mxu0 0
    %873 = vmatpush1.bf16.msra.mxu0 0
    %874 = vmatprep.subr.bf16.mxu0 0
    %875 = vmatpush1.bf16.msra.mxu0 0
    %876 = vmatprep.subr.bf16.mxu0 0
    %877 = vmatpush1.bf16.msra.mxu0 0
    %878 = vmatprep.subr.bf16.mxu0 0
    %879 = vmatpush1.bf16.msra.mxu0 0
    %880 = vmatprep.mubr.bf16.mxu0 0
    %881 = vmatmul.mubr.bf16.gmra.mrb[0].mxu0 %v798
    %v882 = vpop.f32.mrb[0].mxu0
    %v883 = vadd.f32 %v766, %v882
    %v884 = vpop.f32.mrb[0].mxu0
    %v885 = vpop.f32.mrb[0].mxu0
    %v886 = vpop.f32.mrb[0].mxu0
    %887 = vdwg.mxu0
    %888 = vst [vmem:[#allocation5] sm:$0xff] %v883
    // Predicated region
    $region30: #{tpu_custom_call.1} parent=1 // pred_check
      _
    $region31: #{tpu_custom_call.1} parent=1 // pred_check_branch
      %890 = sbr.rel (0) target = $region33
    $region32: #{tpu_custom_call.1} parent=1 // pred_region
      %s892 = ssub.s32 128, 128
      %893 = vsyncadd [#allocation4], %s892
      %s895 = sshll.u32 [#allocation5], 4
      %s896 = int_to_ptr.vmem [resolvable:$true] %s895
      %898 = dma.vmem_to_hbm [thread:$0]  %s896, 128, %s6, [#allocation4]
    $region33: #{tpu_custom_call.1} parent=1 // pred_fallthru
      _
    // Predicated region
    $region34: #{tpu_custom_call.1} parent=1 // pred_check
      _
    $region35: #{tpu_custom_call.1} parent=1 // pred_check_branch
      %900 = sbr.rel (0) target = $region37
    $region36: #{tpu_custom_call.1} parent=1 // pred_region
      %901 = dma.done [#allocation4], 128
    $region37: #{tpu_custom_call.1} parent=1 // pred_fallthru
      _
    %902 = vsyncpa [#allocation3], 1
    %903 = vsyncpa [#allocation4], 1

</llo_original>
